<compile_context>
chip_gen: v6e
topology: v6e:2x2x1
jax: 0.10.0
libtpu: 0.0.40
codegen_flags: <defaults>
</compile_context>

<pallas_src>
import jax
import jax.numpy as jnp
from jax.experimental import pallas as pl
from jax.experimental.pallas import tpu as pltpu


def channel_block_kernel(x_ref, g_ref, wx_ref, wg_ref, shift_ref, o_ref):
    # x_ref: (B_tile, F_l, HW)   g_ref: (B_tile, F_g, HW)   (channels on sublanes,
    #                                                         HW lane-dense)
    # wx_ref: (F_l, F_l)  wg_ref: (F_l, F_g)   -- [out, in], BN scale pre-folded
    # shift_ref: (F_l, 1)                      -- BN shift (added post-pool)
    b_tile = x_ref.shape[0]
    for b in range(b_tile):  # static unroll over the small per-step batch tile
        xb = x_ref[b]        # (F_l, HW)
        gb = g_ref[b]        # (F_g, HW)

        # 1x1 conv on cat((x, g), channel) with BN scale folded into the weights.
        y = jnp.dot(wx_ref[...], xb, preferred_element_type=jnp.float32)
        y = y + jnp.dot(wg_ref[...], gb, preferred_element_type=jnp.float32)  # (F_l, HW)

        # Global average pool over spatial (lane reduce).  The BN shift is a
        # per-channel constant, so adding it after the mean is exact and saves
        # an F_l x HW VPU add.
        pooled = jnp.mean(y, axis=-1, keepdims=True) + shift_ref[...]  # (F_l, 1)

        # Softmax over channels (sublane reduce); reciprocal on the EUP.
        m = jnp.max(pooled, axis=0, keepdims=True)
        e = jnp.exp(pooled - m)
        inv = pl.reciprocal(jnp.sum(e, axis=0, keepdims=True), approx=True)
        c_a = e * inv                                                  # (F_l, 1)

        # out = c_a * x + x   (channel gate broadcast over the HW lanes)
        o_ref[b] = (xb * (c_a + 1.0)).astype(o_ref.dtype)


def _pick_batch_tile(n):
    """Batch elements per grid step: amortize per-step overhead for larger N
    while keeping >= 2 grid steps when possible (v7x megacore)."""
    for bt in (8, 4, 2):
        if n % bt == 0 and n // bt >= 2:
            return bt
    return 1


def channel_block(x_ncl, g_ncl, wx_scaled, wg_scaled, shift):
    """x_ncl: (N, F_l, HW), g_ncl: (N, F_g, HW) -> (N, F_l, HW)."""
    N, F_l, HW = x_ncl.shape
    F_g = g_ncl.shape[1]
    bt = _pick_batch_tile(N)
    assert N % bt == 0

    return pl.pallas_call(
        channel_block_kernel,
        out_shape=jax.ShapeDtypeStruct((N, F_l, HW), x_ncl.dtype),
        grid_spec=pltpu.PrefetchScalarGridSpec(
            num_scalar_prefetch=0,
            grid=(N // bt,),
            in_specs=[
                pl.BlockSpec((bt, F_l, HW), lambda n: (n, 0, 0)),
                pl.BlockSpec((bt, F_g, HW), lambda n: (n, 0, 0)),
                # Tiny weight/shift operands: whole-array blocks with constant
                # block indices so they stay resident across the grid.
                pl.BlockSpec((F_l, F_l), lambda n: (0, 0)),
                pl.BlockSpec((F_l, F_g), lambda n: (0, 0)),
                pl.BlockSpec((F_l, 1), lambda n: (0, 0)),
            ],
            out_specs=pl.BlockSpec((bt, F_l, HW), lambda n: (n, 0, 0)),
        ),
        compiler_params=pltpu.CompilerParams(
            dimension_semantics=("parallel",)),
    )(x_ncl, g_ncl, wx_scaled, wg_scaled, shift)


def channel_block_ref(x_ncl, g_ncl, conv_w, scale, shift_vec):
    """Pure-JAX reference in the original op order: conv -> BN -> pool -> softmax -> gate."""
    feat = jnp.concatenate([x_ncl, g_ncl], axis=1)            # (N, F_in, HW)
    y = jnp.einsum("oc,ncl->nol", conv_w, feat)               # 1x1 conv
    y = y * scale[None, :, None] + shift_vec[None, :, None]   # eval-mode BN
    pooled = jnp.mean(y, axis=-1, keepdims=True)              # (N, F_l, 1)
    c_a = jax.nn.softmax(pooled, axis=1)                      # softmax over channels
    return c_a * x_ncl + x_ncl


if __name__ == "__main__":
    # Small shapes consistent with the module: batch=2, F_g=F_l=4, spatial=16x16.
    N, F_g, F_l, H, W = 2, 4, 4, 16, 16
    F_in = F_g + F_l
    HW = H * W

    key = jax.random.PRNGKey(0)
    kx, kg, kw, kgam, kbet, kmu, kvar = jax.random.split(key, 7)

    # PyTorch-style NCHW inputs.
    x_nchw = jax.random.normal(kx, (N, F_l, H, W), dtype=jnp.float32)
    g_nchw = jax.random.normal(kg, (N, F_g, H, W), dtype=jnp.float32)

    # Conv2d(F_in, F_l, 1x1, bias=False) weight as (out, in); deterministic init.
    conv_w = 0.1 * jax.random.normal(kw, (F_l, F_in), dtype=jnp.float32)

    # BatchNorm2d(F_l) in eval mode, deterministic params / running stats.
    eps = 1e-5
    gamma = 1.0 + 0.1 * jax.random.normal(kgam, (F_l,), dtype=jnp.float32)
    beta = 0.1 * jax.random.normal(kbet, (F_l,), dtype=jnp.float32)
    running_mean = 0.1 * jax.random.normal(kmu, (F_l,), dtype=jnp.float32)
    running_var = 1.0 + 0.1 * jax.nn.softplus(
        jax.random.normal(kvar, (F_l,), dtype=jnp.float32))
    # TODO(synk): training-mode BatchNorm (batch statistics) is not reproduced;
    # eval-mode BN is folded into the conv weights + a post-pool shift below.
    scale = gamma / jnp.sqrt(running_var + eps)                  # (F_l,)
    shift_vec = beta - running_mean * scale                      # (F_l,)
    shift = shift_vec.reshape(F_l, 1)

    # Split conv weight along *input* channels: cat((x, g), dim=1) -> the first
    # F_l input channels hit x.  Fold the per-output-channel BN scale into the
    # weights so the kernel has no per-pixel scale multiply.
    wx_scaled = conv_w[:, :F_l] * scale[:, None]                 # (F_l_out, F_l_in)
    wg_scaled = conv_w[:, F_l:] * scale[:, None]                 # (F_l_out, F_g_in)

    # NCHW -> (N, C, H*W): a pure reshape (no host transposes); channels land on
    # sublanes and H*W (=256, multiple of 128) on lanes.
    x_ncl = x_nchw.reshape(N, F_l, HW)
    g_ncl = g_nchw.reshape(N, F_g, HW)

    out_ncl = channel_block(x_ncl, g_ncl, wx_scaled, wg_scaled, shift)
    out_ncl = jax.block_until_ready(out_ncl)

    # Back to NCHW to match the PyTorch module's output layout (pure reshape).
    out_nchw = out_ncl.reshape(N, F_l, H, W)

    # Sanity check against a pure-JAX reference (original op order, unfolded BN).
    ref = channel_block_ref(x_ncl, g_ncl, conv_w, scale, shift_vec)
    err = jnp.max(jnp.abs(out_ncl - ref))
    # Tolerance loosened slightly (2e-3) for the approximate EUP reciprocal in the softmax.
    assert jnp.allclose(out_ncl, ref, atol=2e-3, rtol=2e-3), (
        f"mismatch vs reference (max |err| = {err})")
    assert out_nchw.shape == (N, F_l, H, W)

    print("KERNEL_OK")
</pallas_src>

<mosaic_0001>
module attributes {stable_mosaic.version = 11 : i64} {
  func.func @channel_block_kernel(%arg0: i32, %arg1: memref<1x4x256xf32, #tpu.memory_space<vmem>>, %arg2: memref<1x4x256xf32, #tpu.memory_space<vmem>>, %arg3: memref<4x4xf32, #tpu.memory_space<vmem>>, %arg4: memref<4x4xf32, #tpu.memory_space<vmem>>, %arg5: memref<4x1xf32, #tpu.memory_space<vmem>>, %arg6: memref<1x4x256xf32, #tpu.memory_space<vmem>>) attributes {dimension_semantics = [#tpu.dimension_semantics<parallel>], iteration_bounds = array<i64: 2>, scalar_prefetch = 0 : i64, scratch_operands = 0 : i64, tpu.core_type = #tpu.core_type<tc>, window_params = [{transform_indices = @transform_0, window_bounds = array<i64: 1, 4, 256>}, {transform_indices = @transform_1, window_bounds = array<i64: 1, 4, 256>}, {pipeline_mode = #tpu.pipeline_mode<synchronous>, transform_indices = @transform_2, window_bounds = array<i64: 4, 4>}, {pipeline_mode = #tpu.pipeline_mode<synchronous>, transform_indices = @transform_3, window_bounds = array<i64: 4, 4>}, {pipeline_mode = #tpu.pipeline_mode<synchronous>, transform_indices = @transform_4, window_bounds = array<i64: 4, 1>}, {transform_indices = @transform_5, window_bounds = array<i64: 1, 4, 256>}]} {
    %c0 = arith.constant 0 : index
    %c0_0 = arith.constant 0 : index
    %c0_1 = arith.constant 0 : index
    %0 = vector.load %arg1[%c0, %c0_0, %c0_1] : memref<1x4x256xf32, #tpu.memory_space<vmem>>, vector<1x4x256xf32>
    %1 = vector.shape_cast %0 : vector<1x4x256xf32> to vector<4x256xf32>
    %c0_2 = arith.constant 0 : index
    %c0_3 = arith.constant 0 : index
    %c0_4 = arith.constant 0 : index
    %2 = vector.load %arg2[%c0_2, %c0_3, %c0_4] : memref<1x4x256xf32, #tpu.memory_space<vmem>>, vector<1x4x256xf32>
    %3 = vector.shape_cast %2 : vector<1x4x256xf32> to vector<4x256xf32>
    %c0_5 = arith.constant 0 : index
    %c0_6 = arith.constant 0 : index
    %4 = vector.load %arg3[%c0_5, %c0_6] : memref<4x4xf32, #tpu.memory_space<vmem>>, vector<4x4xf32>
    %cst = arith.constant dense<0.000000e+00> : vector<4x256xf32>
    %5 = tpu.matmul %4, %1, %cst {dimension_numbers = #tpu.dot_dimension_numbers<[1], [0], [0], [1], [0, 0, 1, 1], [], []>} : vector<4x4xf32>, vector<4x256xf32>, vector<4x256xf32> -> vector<4x256xf32>
    %c0_7 = arith.constant 0 : index
    %c0_8 = arith.constant 0 : index
    %6 = vector.load %arg4[%c0_7, %c0_8] : memref<4x4xf32, #tpu.memory_space<vmem>>, vector<4x4xf32>
    %cst_9 = arith.constant dense<0.000000e+00> : vector<4x256xf32>
    %7 = tpu.matmul %6, %3, %cst_9 {dimension_numbers = #tpu.dot_dimension_numbers<[1], [0], [0], [1], [0, 0, 1, 1], [], []>} : vector<4x4xf32>, vector<4x256xf32>, vector<4x256xf32> -> vector<4x256xf32>
    %8 = arith.addf %5, %7 : vector<4x256xf32>
    %cst_10 = arith.constant dense<0.000000e+00> : vector<4xf32>
    %9 = vector.multi_reduction <add>, %8, %cst_10 [1] : vector<4x256xf32> to vector<4xf32>
    %10 = vector.shape_cast %9 : vector<4xf32> to vector<4x1xf32>
    %cst_11 = arith.constant 2.560000e+02 : f32
    %11 = vector.broadcast %cst_11 : f32 to vector<4x1xf32>
    %12 = arith.divf %10, %11 : vector<4x1xf32>
    %c0_12 = arith.constant 0 : index
    %c0_13 = arith.constant 0 : index
    %13 = vector.load %arg5[%c0_12, %c0_13] : memref<4x1xf32, #tpu.memory_space<vmem>>, vector<4x1xf32>
    %14 = arith.addf %12, %13 : vector<4x1xf32>
    %cst_14 = arith.constant dense<0xFF800000> : vector<1xf32>
    %15 = vector.multi_reduction <maximumf>, %14, %cst_14 [0] : vector<4x1xf32> to vector<1xf32>
    %16 = vector.shape_cast %15 : vector<1xf32> to vector<1x1xf32>
    %17 = vector.broadcast %16 : vector<1x1xf32> to vector<4x1xf32>
    %18 = arith.subf %14, %17 : vector<4x1xf32>
    %19 = math.exp %18 : vector<4x1xf32>
    %cst_15 = arith.constant dense<0.000000e+00> : vector<1xf32>
    %20 = vector.multi_reduction <add>, %19, %cst_15 [0] : vector<4x1xf32> to vector<1xf32>
    %21 = vector.shape_cast %20 : vector<1xf32> to vector<1x1xf32>
    %22 = tpu.reciprocal %21 {approx = true} : vector<1x1xf32> -> vector<1x1xf32>
    %23 = vector.broadcast %22 : vector<1x1xf32> to vector<4x1xf32>
    %24 = arith.mulf %19, %23 : vector<4x1xf32>
    %cst_16 = arith.constant 1.000000e+00 : f32
    %25 = vector.broadcast %cst_16 : f32 to vector<4x1xf32>
    %26 = arith.addf %24, %25 : vector<4x1xf32>
    %27 = vector.broadcast %26 : vector<4x1xf32> to vector<4x256xf32>
    %28 = arith.mulf %1, %27 : vector<4x256xf32>
    %c0_17 = arith.constant 0 : index
    %c0_18 = arith.constant 0 : index
    %c0_19 = arith.constant 0 : index
    %29 = vector.load %arg6[%c0_17, %c0_18, %c0_19] : memref<1x4x256xf32, #tpu.memory_space<vmem>>, vector<1x4x256xf32>
    %30 = vector.shape_cast %29 : vector<1x4x256xf32> to vector<4x256xf32>
    %31 = vector.shape_cast %28 : vector<4x256xf32> to vector<1x4x256xf32>
    tpu.vector_store %arg6[%c0_17, %c0_18, %c0_19], %31 {strides = array<i32>} : memref<1x4x256xf32, #tpu.memory_space<vmem>>, vector<1x4x256xf32>,
    return
  }
  func.func @transform_0(%arg0: i32) -> (i32, i32, i32) {
    %c0_i32 = arith.constant 0 : i32
    %c0_i32_0 = arith.constant 0 : i32
    %c0_i32_1 = arith.constant 0 : i32
    return %arg0, %c0_i32, %c0_i32_0 : i32, i32, i32
  }
  func.func @transform_1(%arg0: i32) -> (i32, i32, i32) {
    %c0_i32 = arith.constant 0 : i32
    %c0_i32_0 = arith.constant 0 : i32
    %c0_i32_1 = arith.constant 0 : i32
    return %arg0, %c0_i32, %c0_i32_0 : i32, i32, i32
  }
  func.func @transform_2(%arg0: i32) -> (i32, i32) {
    %c0_i32 = arith.constant 0 : i32
    %c0_i32_0 = arith.constant 0 : i32
    %c0_i32_1 = arith.constant 0 : i32
    return %c0_i32, %c0_i32_0 : i32, i32
  }
  func.func @transform_3(%arg0: i32) -> (i32, i32) {
    %c0_i32 = arith.constant 0 : i32
    %c0_i32_0 = arith.constant 0 : i32
    %c0_i32_1 = arith.constant 0 : i32
    return %c0_i32, %c0_i32_0 : i32, i32
  }
  func.func @transform_4(%arg0: i32) -> (i32, i32) {
    %c0_i32 = arith.constant 0 : i32
    %c0_i32_0 = arith.constant 0 : i32
    %c0_i32_1 = arith.constant 0 : i32
    return %c0_i32, %c0_i32_0 : i32, i32
  }
  func.func @transform_5(%arg0: i32) -> (i32, i32, i32) {
    %c0_i32 = arith.constant 0 : i32
    %c0_i32_0 = arith.constant 0 : i32
    %c0_i32_1 = arith.constant 0 : i32
    return %arg0, %c0_i32, %c0_i32_0 : i32, i32, i32
  }
}

</mosaic_0001>

<llo_original>
// kernel: tpu_custom_call.1
$region0: #{tpu_custom_call.1}
  #allocation0 [shape = 'u32[]', space=smem, size = 0x4, offset = 0x4, fixed_abs, tag = 'smem constant byte address 0x4 - core index']
  #allocation1 [shape = 'u32[144,128]{1,0:T(1,128)}', space=vmem, size = 0x12000, scoped, tag = 'internal scratch']
  %s0 = inlined_call_operand.hbm [shape: f32[2,4,256], index: 0, kind: input, shape index: {}]
  %s1 = inlined_call_operand.hbm [shape: f32[2,4,256], index: 1, kind: input, shape index: {}]
  %s2 = inlined_call_operand.vmem [shape: f32[4,4], index: 2, kind: input, shape index: {}]
  %s3 = inlined_call_operand.vmem [shape: f32[4,4], index: 3, kind: input, shape index: {}]
  %s4 = inlined_call_operand.vmem [shape: f32[4,1], index: 4, kind: input, shape index: {}]
  %s5 = inlined_call_operand.hbm [shape: f32[2,4,256], index: 5, kind: output, shape index: {}]
  %s6 = sld [smem:[#allocation0]]
  $region61: #{tpu_custom_call.1} parent=0
    _
  %s8 = ssub.s32 1, %s6
  %s9 = scalar_select 0, %s8, %s6
  $region1: #{tpu_custom_call.1} parent=0
    #allocation2 [shape = 'u8[8192]{0}', space=vmem, size = 0x2000, scoped, tag = 'input window, operand 0']
    #allocation3 [shape = 's32[2]{0}', space=sflag, size = 0x8, scoped, tag = 'scoped memory for tpu_custom_call.1']
    #allocation4 [shape = 's32[2]{0}', space=sflag, size = 0x8, scoped, tag = 'scoped memory for tpu_custom_call.1']
    #allocation5 [shape = 'u8[8192]{0}', space=vmem, size = 0x2000, scoped, tag = 'input window, operand 1']
    #allocation6 [shape = 's32[2]{0}', space=sflag, size = 0x8, scoped, tag = 'scoped memory for tpu_custom_call.1']
    #allocation7 [shape = 'u8[8192]{0}', space=vmem, size = 0x2000, scoped, tag = 'output window, operand 0']
    %10 = vsyncpa [#allocation3], 0
    %s11 = scalar_lea.sflag [#allocation3], 1
    %12 = vsyncpa %s11, 0
    %13 = vsyncpa [#allocation6], 0
    %s14 = scalar_lea.sflag [#allocation6], 1
    %15 = vsyncpa %s14, 0
    %16 = vsyncpa [#allocation4], 0
    %s17 = scalar_lea.sflag [#allocation4], 1
    %18 = vsyncpa %s17, 0
    loop: start=0, step=1, limit=4
    $region2: #{tpu_custom_call.1} parent=1 // loop_pre_header
      _
    $region3: #{tpu_custom_call.1} parent=1 // loop_header
      %s20 = sphi 0, %s24
      %p21 = scmp.ge.s32.totalorder %s20, 4
      %s30 = sphi 0, %s32
      %s33 = sphi 0, %s30
      %s34 = sphi 0, %s33
      %s50 = sphi 0, %s34
      %s56 = sphi 0, %s58
      %s59 = sphi 0, %s56
      %s60 = sphi 0, %s59
      %s76 = sphi 0, %s60
      %s80 = sphi 0, %s80
      %s82 = sphi 0, %s80
      %s83 = sphi 0, %s82
      %s97 = sphi 0, %s83
      %s101 = sphi 0, %s101
      %s103 = sphi 0, %s101
      %s104 = sphi 0, %s103
      %s118 = sphi 0, %s104
      %s122 = sphi 0, %s122
      %s124 = sphi 0, %s122
      %s125 = sphi 0, %s124
      %s139 = sphi 0, %s125
      %s145 = sphi 0, %s147
      %s148 = sphi 0, %s145
      %s149 = sphi 0, %s148
      %s165 = sphi 0, %s149
    $region4: #{tpu_custom_call.1} parent=1 // loop_header_branch
      %23 = sbr.rel (%p21) target = $region8
    $region5: #{tpu_custom_call.1} parent=1 // loop_body
      %s25 = ssub.s32 %s20, 1
      %s26 = ssub.s32 %s20, 2
      %s27 = sadd.s32 %s20, 1
      %s28 = ssub.s32 %s20, %s27
      %p29 = scmp.eq.s32.totalorder %s28, 0
      %s31 = sadd.s32 %s30, 1
      %s32 = scalar_select %p29, %s30, %s31
      %p35 = pneg %p29
      %p36 = scmp.eq.s32.totalorder %s20, 1
      %p37 = por %p35, %p36
      %p38 = scmp.ne.s32.totalorder %s30, %s33
      %p39 = scmp.eq.s32.totalorder %s20, 0
      %p40 = por %p38, %p39
      %p41 = scmp.ne.s32.totalorder %s30, %s33
      %p42 = scmp.eq.s32.totalorder %s25, 1
      %p43 = por %p41, %p42
      %p44 = scmp.ne.s32.totalorder %s33, %s34
      %p45 = scmp.eq.s32.totalorder %s25, 0
      %p46 = por %p44, %p45
      %p47 = scmp.ne.s32.totalorder %s33, %s34
      %p48 = scmp.eq.s32.totalorder %s26, 1
      %p49 = por %p47, %p48
      %p51 = scmp.ne.s32.totalorder %s34, %s50
      %p52 = scmp.eq.s32.totalorder %s26, 0
      %p53 = por %p51, %p52
      %s54 = ssub.s32 %s20, %s27
      %p55 = scmp.eq.s32.totalorder %s54, 0
      %s57 = sadd.s32 %s56, 1
      %s58 = scalar_select %p55, %s56, %s57
      %p61 = pneg %p55
      %p62 = scmp.eq.s32.totalorder %s20, 1
      %p63 = por %p61, %p62
      %p64 = scmp.ne.s32.totalorder %s56, %s59
      %p65 = scmp.eq.s32.totalorder %s20, 0
      %p66 = por %p64, %p65
      %p67 = scmp.ne.s32.totalorder %s56, %s59
      %p68 = scmp.eq.s32.totalorder %s25, 1
      %p69 = por %p67, %p68
      %p70 = scmp.ne.s32.totalorder %s59, %s60
      %p71 = scmp.eq.s32.totalorder %s25, 0
      %p72 = por %p70, %p71
      %p73 = scmp.ne.s32.totalorder %s59, %s60
      %p74 = scmp.eq.s32.totalorder %s26, 1
      %p75 = por %p73, %p74
      %p77 = scmp.ne.s32.totalorder %s60, %s76
      %p78 = scmp.eq.s32.totalorder %s26, 0
      %p79 = por %p77, %p78
      %s81 = sadd.s32 %s80, 1
      %p84 = scmp.eq.s32.totalorder %s20, 1
      %p85 = scmp.ne.s32.totalorder %s80, %s82
      %p86 = scmp.eq.s32.totalorder %s20, 0
      %p87 = por %p85, %p86
      %p88 = scmp.ne.s32.totalorder %s80, %s82
      %p89 = scmp.eq.s32.totalorder %s25, 1
      %p90 = por %p88, %p89
      %p91 = scmp.ne.s32.totalorder %s82, %s83
      %p92 = scmp.eq.s32.totalorder %s25, 0
      %p93 = por %p91, %p92
      %p94 = scmp.ne.s32.totalorder %s82, %s83
      %p95 = scmp.eq.s32.totalorder %s26, 1
      %p96 = por %p94, %p95
      %p98 = scmp.ne.s32.totalorder %s83, %s97
      %p99 = scmp.eq.s32.totalorder %s26, 0
      %p100 = por %p98, %p99
      %s102 = sadd.s32 %s101, 1
      %p105 = scmp.eq.s32.totalorder %s20, 1
      %p106 = scmp.ne.s32.totalorder %s101, %s103
      %p107 = scmp.eq.s32.totalorder %s20, 0
      %p108 = por %p106, %p107
      %p109 = scmp.ne.s32.totalorder %s101, %s103
      %p110 = scmp.eq.s32.totalorder %s25, 1
      %p111 = por %p109, %p110
      %p112 = scmp.ne.s32.totalorder %s103, %s104
      %p113 = scmp.eq.s32.totalorder %s25, 0
      %p114 = por %p112, %p113
      %p115 = scmp.ne.s32.totalorder %s103, %s104
      %p116 = scmp.eq.s32.totalorder %s26, 1
      %p117 = por %p115, %p116
      %p119 = scmp.ne.s32.totalorder %s104, %s118
      %p120 = scmp.eq.s32.totalorder %s26, 0
      %p121 = por %p119, %p120
      %s123 = sadd.s32 %s122, 1
      %p126 = scmp.eq.s32.totalorder %s20, 1
      %p127 = scmp.ne.s32.totalorder %s122, %s124
      %p128 = scmp.eq.s32.totalorder %s20, 0
      %p129 = por %p127, %p128
      %p130 = scmp.ne.s32.totalorder %s122, %s124
      %p131 = scmp.eq.s32.totalorder %s25, 1
      %p132 = por %p130, %p131
      %p133 = scmp.ne.s32.totalorder %s124, %s125
      %p134 = scmp.eq.s32.totalorder %s25, 0
      %p135 = por %p133, %p134
      %p136 = scmp.ne.s32.totalorder %s124, %s125
      %p137 = scmp.eq.s32.totalorder %s26, 1
      %p138 = por %p136, %p137
      %p140 = scmp.ne.s32.totalorder %s125, %s139
      %p141 = scmp.eq.s32.totalorder %s26, 0
      %p142 = por %p140, %p141
      %s143 = ssub.s32 %s20, %s27
      %p144 = scmp.eq.s32.totalorder %s143, 0
      %s146 = sadd.s32 %s145, 1
      %s147 = scalar_select %p144, %s145, %s146
      %p150 = pneg %p144
      %p151 = scmp.eq.s32.totalorder %s20, 1
      %p152 = por %p150, %p151
      %p153 = scmp.ne.s32.totalorder %s145, %s148
      %p154 = scmp.eq.s32.totalorder %s20, 0
      %p155 = por %p153, %p154
      %p156 = scmp.ne.s32.totalorder %s145, %s148
      %p157 = scmp.eq.s32.totalorder %s25, 1
      %p158 = por %p156, %p157
      %p159 = scmp.ne.s32.totalorder %s148, %s149
      %p160 = scmp.eq.s32.totalorder %s25, 0
      %p161 = por %p159, %p160
      %p162 = scmp.ne.s32.totalorder %s148, %s149
      %p163 = scmp.eq.s32.totalorder %s26, 1
      %p164 = por %p162, %p163
      %p166 = scmp.ne.s32.totalorder %s149, %s165
      %p167 = scmp.eq.s32.totalorder %s26, 0
      %p168 = por %p166, %p167
      %p169 = scmp.le.s32.totalorder 1, %s20
      %p170 = scmp.lt.s32.totalorder %s20, 3
      %p171 = pnand %p169, %p170
      %p172 = pneg %p171
      // Predicated region
      $region9: #{tpu_custom_call.1} parent=5 // pred_check
        _
      $region10: #{tpu_custom_call.1} parent=5 // pred_check_branch
        %174 = sbr.rel (%p171) target = $region12
      $region11: #{tpu_custom_call.1} parent=5 // pred_region
        %s175 = ssub.s32 %s20, 1
        // Predicated region
        $region13: #{tpu_custom_call.1} parent=11 // pred_check
          %p176 = pneg %p93
        $region14: #{tpu_custom_call.1} parent=11 // pred_check_branch
          %178 = sbr.rel (%p176) target = $region16
        $region15: #{tpu_custom_call.1} parent=11 // pred_region
          _
        $region16: #{tpu_custom_call.1} parent=11 // pred_fallthru
          _
        // Predicated region
        $region17: #{tpu_custom_call.1} parent=11 // pred_check
          %p179 = pneg %p114
        $region18: #{tpu_custom_call.1} parent=11 // pred_check_branch
          %181 = sbr.rel (%p179) target = $region20
        $region19: #{tpu_custom_call.1} parent=11 // pred_region
          _
        $region20: #{tpu_custom_call.1} parent=11 // pred_fallthru
          _
        // Predicated region
        $region21: #{tpu_custom_call.1} parent=11 // pred_check
          %p182 = pneg %p135
        $region22: #{tpu_custom_call.1} parent=11 // pred_check_branch
          %184 = sbr.rel (%p182) target = $region24
        $region23: #{tpu_custom_call.1} parent=11 // pred_region
          _
        $region24: #{tpu_custom_call.1} parent=11 // pred_fallthru
          _
      $region12: #{tpu_custom_call.1} parent=5 // pred_fallthru
        _
      %p185 = scmp.lt.s32.totalorder %s20, 2
      // Predicated region
      $region25: #{tpu_custom_call.1} parent=5 // pred_check
        %p186 = pneg %p185
      $region26: #{tpu_custom_call.1} parent=5 // pred_check_branch
        %188 = sbr.rel (%p186) target = $region28
      $region27: #{tpu_custom_call.1} parent=5 // pred_region
        // Predicated region
        $region29: #{tpu_custom_call.1} parent=27 // pred_check
          %p189 = pneg %p40
        $region30: #{tpu_custom_call.1} parent=27 // pred_check_branch
          %191 = sbr.rel (%p189) target = $region32
        $region31: #{tpu_custom_call.1} parent=27 // pred_region
          %s192 = sand.u32 %s30, 1
          %s193 = scalar_lea.sflag [#allocation3], %s192
          %s194 = sand.u32 %s30, 1
          %s195 = smul.addr %s194, 8
          %s196 = scalar_lea.vmem [#allocation2], %s195
          %s198 = ssub.s32 128, 128
          %199 = vsyncadd %s193, %s198
          %s200 = smul.addr %s20, 2
          %s201 = smul.addr %s200, 64
          %s202 = scalar_lea.hbm %s0, %s201
          %s204 = sshll.u32 %s196, 4
          %s205 = int_to_ptr.vmem [resolvable:$true] %s204
          %207 = dma.hbm_to_vmem [thread:$0]  %s202, 128, %s205, %s193
        $region32: #{tpu_custom_call.1} parent=27 // pred_fallthru
          _
        // Predicated region
        $region33: #{tpu_custom_call.1} parent=27 // pred_check
          %p208 = pneg %p66
        $region34: #{tpu_custom_call.1} parent=27 // pred_check_branch
          %210 = sbr.rel (%p208) target = $region36
        $region35: #{tpu_custom_call.1} parent=27 // pred_region
          %s211 = sand.u32 %s56, 1
          %s212 = scalar_lea.sflag [#allocation6], %s211
          %s213 = sand.u32 %s56, 1
          %s214 = smul.addr %s213, 8
          %s215 = scalar_lea.vmem [#allocation5], %s214
          %s217 = ssub.s32 128, 128
          %218 = vsyncadd %s212, %s217
          %s219 = smul.addr %s20, 2
          %s220 = smul.addr %s219, 64
          %s221 = scalar_lea.hbm %s1, %s220
          %s223 = sshll.u32 %s215, 4
          %s224 = int_to_ptr.vmem [resolvable:$true] %s223
          %226 = dma.hbm_to_vmem [thread:$0]  %s221, 128, %s224, %s212
        $region36: #{tpu_custom_call.1} parent=27 // pred_fallthru
          _
      $region28: #{tpu_custom_call.1} parent=5 // pred_fallthru
        _
      %p227 = scmp.le.s32.totalorder 1, %s20
      %p228 = scmp.lt.s32.totalorder %s20, 3
      %p229 = pnand %p227, %p228
      %p230 = pneg %p229
      // Predicated region
      $region37: #{tpu_custom_call.1} parent=5 // pred_check
        _
      $region38: #{tpu_custom_call.1} parent=5 // pred_check_branch
        %232 = sbr.rel (%p229) target = $region40
      $region39: #{tpu_custom_call.1} parent=5 // pred_region
        %s233 = ssub.s32 %s20, 1
        %s234 = sand.u32 %s33, 1
        %s235 = scalar_lea.sflag [#allocation3], %s234
        %s236 = sand.u32 %s33, 1
        %s237 = smul.addr %s236, 8
        %s238 = scalar_lea.vmem [#allocation2], %s237
        // Predicated region
        $region41: #{tpu_custom_call.1} parent=39 // pred_check
          %p239 = pneg %p46
        $region42: #{tpu_custom_call.1} parent=39 // pred_check_branch
          %241 = sbr.rel (%p239) target = $region44
        $region43: #{tpu_custom_call.1} parent=39 // pred_region
          %242 = dma.done %s235, 128
        $region44: #{tpu_custom_call.1} parent=39 // pred_fallthru
          _
        %s243 = sand.u32 %s59, 1
        %s244 = scalar_lea.sflag [#allocation6], %s243
        %s245 = sand.u32 %s59, 1
        %s246 = smul.addr %s245, 8
        %s247 = scalar_lea.vmem [#allocation5], %s246
        // Predicated region
        $region45: #{tpu_custom_call.1} parent=39 // pred_check
          %p248 = pneg %p72
        $region46: #{tpu_custom_call.1} parent=39 // pred_check_branch
          %250 = sbr.rel (%p248) target = $region48
        $region47: #{tpu_custom_call.1} parent=39 // pred_region
          %251 = dma.done %s244, 128
        $region48: #{tpu_custom_call.1} parent=39 // pred_fallthru
          _
        %s252 = sand.u32 %s33, 1
        %s253 = scalar_lea.sflag [#allocation3], %s252
        %s254 = sand.u32 %s33, 1
        %s255 = smul.addr %s254, 8
        %s256 = scalar_lea.vmem [#allocation2], %s255
        %p257 = pneg %p46
        %p258 = pneg %p43
        %s259 = sand.u32 %s59, 1
        %s260 = scalar_lea.sflag [#allocation6], %s259
        %s261 = sand.u32 %s59, 1
        %s262 = smul.addr %s261, 8
        %s263 = scalar_lea.vmem [#allocation5], %s262
        %p264 = pneg %p72
        %p265 = pneg %p69
        %p266 = pneg %p93
        %p267 = pneg %p90
        %p268 = pneg %p114
        %p269 = pneg %p111
        %p270 = pneg %p135
        %p271 = pneg %p132
        %p272 = pneg %p161
        %p273 = pneg %p158
        %s274 = sand.u32 %s148, 1
        %s275 = scalar_lea.sflag [#allocation4], %s274
        %s276 = sand.u32 %s148, 1
        %s277 = smul.addr %s276, 8
        %s278 = scalar_lea.vmem [#allocation7], %s277
        %v279 = vld [vmem:[%s238] sm:$0xff]
        %v280 = vld [vmem:[%s247] sm:$0xff]
        %v281 = vld [vmem:[%s2] sm:$0xf]
        %v282 = vld [vmem:[%s3] sm:$0xf]
        %v284 = vcombine.high %v280, %v280
        %vm285 = vcmask 31744
        %v287 = vsel %vm285, %v282, 0
        %vm289 = vcmask 1043456
        %v290 = vsel %vm289, %v280, 0
        %v292 = vsel %vm289, %v284, 0
        %294 = vmatprep.subr.mxu0 0.0
        %295 = vmatpush1.msra.mxu0 0.0
        %296 = vmatprep.subr.mxu0 0.0
        %297 = vmatpush1.msra.mxu0 0.0
        %298 = vmatprep.subr.mxu0 0.0
        %299 = vmatpush1.msra.mxu0 0.0
        %300 = vmatprep.subr.mxu0 0.0
        %301 = vmatpush1.msra.mxu0 0.0
        %302 = vmatprep.subr.mxu0 0.0
        %303 = vmatpush1.msra.mxu0 0.0
        %304 = vmatprep.subr.mxu0 0.0
        %305 = vmatpush1.msra.mxu0 0.0
        %306 = vmatprep.subr.mxu0 0.0
        %307 = vmatpush1.msra.mxu0 0.0
        %308 = vmatprep.subr.mxu0 0.0
        %309 = vmatpush1.msra.mxu0 0.0
        %310 = vmatprep.subr.mxu0 0.0
        %311 = vmatpush1.msra.mxu0 0.0
        %312 = vmatprep.subr.mxu0 0.0
        %313 = vmatpush1.msra.mxu0 0.0
        %314 = vmatprep.subr.mxu0 0.0
        %315 = vmatpush1.msra.mxu0 0.0
        %316 = vmatprep.subr.mxu0 0.0
        %317 = vmatpush1.msra.mxu0 0.0
        %318 = vmatprep.subr.mxu0 0.0
        %319 = vmatpush1.msra.mxu0 0.0
        %320 = vmatprep.subr.mxu0 0.0
        %321 = vmatpush1.msra.mxu0 0.0
        %322 = vmatprep.subr.mxu0 0.0
        %323 = vmatpush1.msra.mxu0 0.0
        %324 = vmatprep.subr.mxu0 %v292
        %325 = vmatpush1.msra.mxu0 %v290
        %326 = vmatprep.subr.mxu0 0.0
        %327 = vmatpush2.msra.mxu0 0.0
        %328 = vmatprep.subr.mxu0 0.0
        %329 = vmatpush2.msra.mxu0 0.0
        %330 = vmatprep.subr.mxu0 0.0
        %331 = vmatpush2.msra.mxu0 0.0
        %332 = vmatprep.subr.mxu0 0.0
        %333 = vmatpush2.msra.mxu0 0.0
        %334 = vmatprep.subr.mxu0 0.0
        %335 = vmatpush2.msra.mxu0 0.0
        %336 = vmatprep.subr.mxu0 0.0
        %337 = vmatpush2.msra.mxu0 0.0
        %338 = vmatprep.subr.mxu0 0.0
        %339 = vmatpush2.msra.mxu0 0.0
        %340 = vmatprep.subr.mxu0 0.0
        %341 = vmatpush2.msra.mxu0 0.0
        %342 = vmatprep.subr.mxu0 0.0
        %343 = vmatpush2.msra.mxu0 0.0
        %344 = vmatprep.subr.mxu0 0.0
        %345 = vmatpush2.msra.mxu0 0.0
        %346 = vmatprep.subr.mxu0 0.0
        %347 = vmatpush2.msra.mxu0 0.0
        %348 = vmatprep.subr.mxu0 0.0
        %349 = vmatpush2.msra.mxu0 0.0
        %350 = vmatprep.subr.mxu0 0.0
        %351 = vmatpush2.msra.mxu0 0.0
        %352 = vmatprep.subr.mxu0 0.0
        %353 = vmatpush2.msra.mxu0 0.0
        %354 = vmatprep.subr.mxu0 0.0
        %355 = vmatpush2.msra.mxu0 0.0
        %356 = vmatprep.subr.mxu0 0.0
        %357 = vmatpush2.msra.mxu0 0.0
        %358 = vmatprep.mubr.f32.mxu0 0.0
        %359 = vmatmul.mubr.f32.gmra.mxu0 %v287
        %v360 = vpop.f32.mrf.mxu0
        %v361 = vadd.f32 0.0, %v360
        %v362 = vpop.f32.mrf.mxu0
        %v363 = vadd.f32 0.0, %v362
        %364 = vdwg.mxu0
        %v366 = vcombine.high %v279, %v279
        %v368 = vsel %vm285, %v281, 0
        %v370 = vsel %vm289, %v279, 0
        %v372 = vsel %vm289, %v366, 0
        %374 = vmatprep.subr.mxu0 0.0
        %375 = vmatpush1.msra.mxu0 0.0
        %376 = vmatprep.subr.mxu0 0.0
        %377 = vmatpush1.msra.mxu0 0.0
        %378 = vmatprep.subr.mxu0 0.0
        %379 = vmatpush1.msra.mxu0 0.0
        %380 = vmatprep.subr.mxu0 0.0
        %381 = vmatpush1.msra.mxu0 0.0
        %382 = vmatprep.subr.mxu0 0.0
        %383 = vmatpush1.msra.mxu0 0.0
        %384 = vmatprep.subr.mxu0 0.0
        %385 = vmatpush1.msra.mxu0 0.0
        %386 = vmatprep.subr.mxu0 0.0
        %387 = vmatpush1.msra.mxu0 0.0
        %388 = vmatprep.subr.mxu0 0.0
        %389 = vmatpush1.msra.mxu0 0.0
        %390 = vmatprep.subr.mxu0 0.0
        %391 = vmatpush1.msra.mxu0 0.0
        %392 = vmatprep.subr.mxu0 0.0
        %393 = vmatpush1.msra.mxu0 0.0
        %394 = vmatprep.subr.mxu0 0.0
        %395 = vmatpush1.msra.mxu0 0.0
        %396 = vmatprep.subr.mxu0 0.0
        %397 = vmatpush1.msra.mxu0 0.0
        %398 = vmatprep.subr.mxu0 0.0
        %399 = vmatpush1.msra.mxu0 0.0
        %400 = vmatprep.subr.mxu0 0.0
        %401 = vmatpush1.msra.mxu0 0.0
        %402 = vmatprep.subr.mxu0 0.0
        %403 = vmatpush1.msra.mxu0 0.0
        %404 = vmatprep.subr.mxu0 %v372
        %405 = vmatpush1.msra.mxu0 %v370
        %406 = vmatprep.subr.mxu0 0.0
        %407 = vmatpush2.msra.mxu0 0.0
        %408 = vmatprep.subr.mxu0 0.0
        %409 = vmatpush2.msra.mxu0 0.0
        %410 = vmatprep.subr.mxu0 0.0
        %411 = vmatpush2.msra.mxu0 0.0
        %412 = vmatprep.subr.mxu0 0.0
        %413 = vmatpush2.msra.mxu0 0.0
        %414 = vmatprep.subr.mxu0 0.0
        %415 = vmatpush2.msra.mxu0 0.0
        %416 = vmatprep.subr.mxu0 0.0
        %417 = vmatpush2.msra.mxu0 0.0
        %418 = vmatprep.subr.mxu0 0.0
        %419 = vmatpush2.msra.mxu0 0.0
        %420 = vmatprep.subr.mxu0 0.0
        %421 = vmatpush2.msra.mxu0 0.0
        %422 = vmatprep.subr.mxu0 0.0
        %423 = vmatpush2.msra.mxu0 0.0
        %424 = vmatprep.subr.mxu0 0.0
        %425 = vmatpush2.msra.mxu0 0.0
        %426 = vmatprep.subr.mxu0 0.0
        %427 = vmatpush2.msra.mxu0 0.0
        %428 = vmatprep.subr.mxu0 0.0
        %429 = vmatpush2.msra.mxu0 0.0
        %430 = vmatprep.subr.mxu0 0.0
        %431 = vmatpush2.msra.mxu0 0.0
        %432 = vmatprep.subr.mxu0 0.0
        %433 = vmatpush2.msra.mxu0 0.0
        %434 = vmatprep.subr.mxu0 0.0
        %435 = vmatpush2.msra.mxu0 0.0
        %436 = vmatprep.subr.mxu0 0.0
        %437 = vmatpush2.msra.mxu0 0.0
        %438 = vmatprep.mubr.f32.mxu0 0.0
        %439 = vmatmul.mubr.f32.gmra.mxu0 %v368
        %v440 = vpop.f32.mrf.mxu0
        %v441 = vadd.f32 %v361, %v440
        %v442 = vpop.f32.mrf.mxu0
        %v443 = vadd.f32 %v363, %v442
        %444 = vdwg.mxu0
        %v445 = vsel %vm289, %v441, 0.0
        %v446 = vsel %vm289, %v443, 0.0
        %v447 = vadd.f32 %v445, %v446
        %448 = vadd.xlane.f32.xlu0 %v447
        %v449 = vpop.xlane.xlu0 %448
        %v450 = vrcp.pop 256.0
        %v451 = vmul.f32 %v449, %v450
        %v452 = vld [vmem:[%s4] sm:$0xf]
        %v453 = vadd.f32 %v451, %v452
        %vm454 = vcmask 3072
        %v455 = vsel %vm454, %v453, -inf
        %v456 = vrot.slane %v455, 4
        %v457 = vmax.f32 %v455, %v456
        %v458 = vrot.slane %v457, 2
        %v459 = vmax.f32 %v457, %v458
        %v460 = vrot.slane %v459, 1
        %v461 = vmax.f32 %v459, %v460
        %v462 = vsub.f32 %v453, %v461
        %v463 = vmul.f32 %v462, 1.442695
        %v464 = vpow.pop %v463
        %v465 = vsel %vm454, %v464, 0.0
        %v466 = vrot.slane %v465, 4
        %v467 = vadd.f32 %v465, %v466
        %v468 = vrot.slane %v467, 2
        %v469 = vadd.f32 %v467, %v468
        %v470 = vrot.slane %v469, 1
        %v471 = vadd.f32 %v469, %v470
        %v472 = vrcp.pop %v471
        %v473 = vmul.f32 %v464, %v472
        %v474 = vadd.f32 %v473, 1.0
        %476 = vset.pattern.permute.xlu0 0
        %477 = vperm.xlu0 %476, %v474
        %v478 = vpop.permute.xlu0 %477
        %v480 = vunpack.c.l.s4 839922192
        %v481 = vunpack.c.0.s8 %v480
        %v482 = vlaneseq
        %v483 = vshrl.u32 %v482, 7
        %v484 = vsub.s32 %v481, %v483
        %v485 = vrot.slane %v478, %v484
        %v487 = vmul.f32 %v279, %v485
        %488 = vst [vmem:[%s278] sm:$0xff] %v487
        %s489 = sand.u32 %s148, 1
        %s490 = scalar_lea.sflag [#allocation4], %s489
        %s491 = sand.u32 %s148, 1
        %s492 = smul.addr %s491, 8
        %s493 = scalar_lea.vmem [#allocation7], %s492
        // Predicated region
        $region49: #{tpu_custom_call.1} parent=39 // pred_check
          %p494 = pneg %p158
        $region50: #{tpu_custom_call.1} parent=39 // pred_check_branch
          %496 = sbr.rel (%p494) target = $region52
        $region51: #{tpu_custom_call.1} parent=39 // pred_region
          %s498 = ssub.s32 128, 128
          %499 = vsyncadd %s490, %s498
          %s500 = smul.addr %s25, 2
          %s501 = smul.addr %s500, 64
          %s502 = scalar_lea.hbm %s5, %s501
          %s504 = sshll.u32 %s493, 4
          %s505 = int_to_ptr.vmem [resolvable:$true] %s504
          %507 = dma.vmem_to_hbm [thread:$0]  %s505, 128, %s502, %s490
        $region52: #{tpu_custom_call.1} parent=39 // pred_fallthru
          _
      $region40: #{tpu_custom_call.1} parent=5 // pred_fallthru
        _
      %p508 = scmp.le.s32.totalorder 2, %s20
      // Predicated region
      $region53: #{tpu_custom_call.1} parent=5 // pred_check
        %p509 = pneg %p508
      $region54: #{tpu_custom_call.1} parent=5 // pred_check_branch
        %511 = sbr.rel (%p509) target = $region56
      $region55: #{tpu_custom_call.1} parent=5 // pred_region
        %s512 = ssub.s32 %s20, 2
        // Predicated region
        $region57: #{tpu_custom_call.1} parent=55 // pred_check
          %p513 = pneg %p164
        $region58: #{tpu_custom_call.1} parent=55 // pred_check_branch
          %515 = sbr.rel (%p513) target = $region60
        $region59: #{tpu_custom_call.1} parent=55 // pred_region
          %s516 = sand.u32 %s149, 1
          %s517 = scalar_lea.sflag [#allocation4], %s516
          %s518 = sand.u32 %s149, 1
          %s519 = smul.addr %s518, 8
          %s520 = scalar_lea.vmem [#allocation7], %s519
          %521 = dma.done %s517, 128
        $region60: #{tpu_custom_call.1} parent=55 // pred_fallthru
          _
      $region56: #{tpu_custom_call.1} parent=5 // pred_fallthru
        _
    $region6: #{tpu_custom_call.1} parent=1 // loop_footer
      %s24 = sadd.s32 1, %s20
    $region7: #{tpu_custom_call.1} parent=1 // loop_footer_branch
      %19 = sbr.rel target = $region3
    $region8: #{tpu_custom_call.1} parent=1 // loop_exit
      _
    %522 = vsyncpa [#allocation3], 1
    %s523 = scalar_lea.sflag [#allocation3], 1
    %524 = vsyncpa %s523, 1
    %525 = vsyncpa [#allocation6], 1
    %s526 = scalar_lea.sflag [#allocation6], 1
    %527 = vsyncpa %s526, 1
    %528 = vsyncpa [#allocation4], 1
    %s529 = scalar_lea.sflag [#allocation4], 1
    %530 = vsyncpa %s529, 1

</llo_original>
